<compile_context>
chip_gen: v7x
topology: tpu7x:2x2x1
jax: 0.10.0
libtpu: 0.0.40
codegen_flags: <defaults>
</compile_context>

<pallas_src>
import functools

import jax
import jax.numpy as jnp
from jax.experimental import pallas as pl
from jax.experimental.pallas import tpu as pltpu


def _round_up(x: int, m: int) -> int:
    return (x + m - 1) // m * m


@functools.lru_cache(maxsize=1)
def _vmem_ceiling_bytes() -> int:
    """Per-core VMEM budget given to Mosaic (leave ~25% headroom for compiler scratch)."""
    try:
        cap = int(pltpu.get_tpu_info().vmem_capacity_bytes)
    except Exception:
        cap = 64 * 1024 * 1024  # conservative: assume v7x-class 64 MiB per TensorCore
    return (cap * 3) // 4       # ~48 MiB on v7x, ~96 MiB on 128 MiB (v5e/v6e) parts


@functools.lru_cache(maxsize=1)
def _use_bf16_elementwise() -> bool:
    """bf16 VPU/EUP paths exist on v6e/v7x; keep f32 elementwise on older parts."""
    try:
        kind = jax.devices()[0].device_kind.lower()
        return ("v6" in kind) or ("v7" in kind)
    except Exception:
        return False


def _memory_net_kernel(x_ref, w1_ref, b1_ref, w2_ref, b2_ref, o_ref, *, bf16_act):
    # x_ref: (tm, Dp)          w1/w2: (Dp, Dp) bf16      b1/b2: (1, Dp) f32
    # o_ref: (tm, Dp) bf16
    x = x_ref[...].astype(jnp.bfloat16)
    # Linear 1 on the MXU (bf16 operands, f32 accumulation) + bias in f32.
    h = jnp.dot(x, w1_ref[...], preferred_element_type=jnp.float32) + b1_ref[...]
    if bf16_act:
        # v6e/v7x: SiLU in bf16 (halves VPU/EUP pressure and the h intermediate).
        h = h.astype(jnp.bfloat16)
        h = h * jax.nn.sigmoid(h)
    else:
        # v5e and older: no bf16 VPU/EUP -> keep the elementwise stage in f32.
        h = h * jax.nn.sigmoid(h)
        h = h.astype(jnp.bfloat16)
    # Dropout -> identity at inference.  Linear 2 + bias, emitted in bf16.
    o = jnp.dot(h, w2_ref[...], preferred_element_type=jnp.float32) + b2_ref[...]
    o_ref[...] = o.astype(o_ref.dtype)


def prepare_memory_params(w1, b1, w2, b2):
    """One-time weight prep: pad the feature dim to a lane-dense multiple of 128
    and cast matmul operands to bf16.  Call once at load time, NOT per forward."""
    D = w1.shape[0]
    Dp = _round_up(D, 128)
    if Dp == D:
        w1_p = w1.astype(jnp.bfloat16)
        w2_p = w2.astype(jnp.bfloat16)
        b1_p = b1.astype(jnp.float32).reshape(1, Dp)
        b2_p = b2.astype(jnp.float32).reshape(1, Dp)
    else:
        w1_p = jnp.zeros((Dp, Dp), jnp.bfloat16).at[:D, :D].set(w1.astype(jnp.bfloat16))
        w2_p = jnp.zeros((Dp, Dp), jnp.bfloat16).at[:D, :D].set(w2.astype(jnp.bfloat16))
        b1_p = jnp.zeros((1, Dp), jnp.float32).at[0, :D].set(b1.astype(jnp.float32))
        b2_p = jnp.zeros((1, Dp), jnp.float32).at[0, :D].set(b2.astype(jnp.float32))
    return w1_p, b1_p, w2_p, b2_p


@functools.partial(jax.jit, static_argnames=("tm", "single_buffer_weights"))
def _forward_impl(query, w1_p, b1_p, w2_p, b2_p, *, tm, single_buffer_weights):
    orig_shape = query.shape
    D = orig_shape[-1]
    Dp = w1_p.shape[0]
    x = query.reshape(-1, D)
    N = x.shape[0]

    bf16_act = _use_bf16_elementwise()

    # Aligned fast path: no activation padding / slicing passes over HBM.
    aligned = (Dp == D) and (N % 128 == 0)
    x_bytes = query.dtype.itemsize if aligned else 2

    # ---- token tile selection (all static at trace time) -------------------
    tm_eff = max(128, min(_round_up(tm, 128), _round_up(N, 128)))
    w_bufs = 1 if single_buffer_weights else 2

    def footprint(t):
        return (2 * t * Dp * x_bytes          # input tiles (double-buffered)
                + 2 * t * Dp * 2              # bf16 output tiles (double-buffered)
                + t * Dp * 4                  # f32 first-layer result h
                + t * Dp * 2                  # bf16 h copy fed to the 2nd matmul
                + w_bufs * 2 * Dp * Dp * 2    # W1, W2 (bf16)
                + w_bufs * 2 * Dp * 4)        # biases (f32)

    ceiling = _vmem_ceiling_bytes()
    # Shrink the token tile instead of letting Mosaic spill / overflow VMEM.
    while tm_eff > 128 and 2 * footprint(tm_eff) > ceiling:
        tm_eff = max(128, _round_up(tm_eff // 2, 128))

    # v7x has two TensorCores: once there is enough work, make sure the
    # ("parallel",) token axis has at least two grid steps.
    if N >= 512 and pl.cdiv(N, tm_eff) < 2:
        tm_eff = max(128, _round_up(pl.cdiv(N, 2), 128))

    # TODO(synk): for real model dims (Dp >~ 2.5k on v7x, ~4-5k on v5e/v6e) the
    #             resident DxD weights no longer fit per-TC VMEM; add an
    #             output-feature grid axis + K-reduction with an f32 accumulator
    #             scratch (pl.when init/finalize) so the weights stream instead.

    # ---- activation staging (only when padding is actually required) -------
    if aligned:
        x_in = x                       # kernel casts to bf16 internally
        n_rows = N
    else:
        n_rows = _round_up(N, tm_eff)
        x_in = (jnp.zeros((n_rows, Dp), jnp.bfloat16)
                .at[:N, :D].set(x.astype(jnp.bfloat16)))

    grid = (pl.cdiv(n_rows, tm_eff),)
    vmem_limit = int(min(max(2 * footprint(tm_eff), 32 * 1024 * 1024), ceiling))

    cost = pl.CostEstimate(
        flops=4 * n_rows * Dp * Dp,                  # two (tm,Dp)x(Dp,Dp) matmuls
        transcendentals=n_rows * Dp,                 # sigmoid
        bytes_accessed=(n_rows * Dp * (x_bytes + 2)  # activations in + out
                        + 2 * Dp * Dp * 2            # weights
                        + 2 * Dp * 4),               # biases
    )

    def const_spec(shape):
        index_map = lambda i: (0,) * len(shape)
        if single_buffer_weights:
            # Constant index_map -> weights are VMEM-resident across the grid;
            # a single pipeline buffer halves resident-weight VMEM.
            return pl.BlockSpec(shape, index_map, pipeline_mode=pl.Buffered(1))
        return pl.BlockSpec(shape, index_map)

    kernel = functools.partial(_memory_net_kernel, bf16_act=bf16_act)

    out = pl.pallas_call(
        kernel,
        out_shape=jax.ShapeDtypeStruct((n_rows, Dp), jnp.bfloat16),
        grid_spec=pltpu.PrefetchScalarGridSpec(
            num_scalar_prefetch=0,
            grid=grid,
            in_specs=[
                pl.BlockSpec((tm_eff, Dp), lambda i: (i, 0)),   # query tile
                const_spec((Dp, Dp)),                           # W1 (in, out)
                const_spec((1, Dp)),                            # b1
                const_spec((Dp, Dp)),                           # W2 (in, out)
                const_spec((1, Dp)),                            # b2
            ],
            out_specs=pl.BlockSpec((tm_eff, Dp), lambda i: (i, 0)),
        ),
        compiler_params=pltpu.CompilerParams(
            dimension_semantics=("parallel",),
            vmem_limit_bytes=vmem_limit,
        ),
        cost_estimate=cost,
    )(x_in, w1_p, b1_p, w2_p, b2_p)

    if not aligned:
        out = out[:N, :D]
    return out.reshape(orig_shape).astype(query.dtype)


def long_term_memory_forward(query, w1_p, b1_p, w2_p, b2_p, *, tm=512):
    """query: [..., D]; padded bf16 params from prepare_memory_params."""
    try:
        return _forward_impl(query, w1_p, b1_p, w2_p, b2_p,
                             tm=tm, single_buffer_weights=True)
    except Exception:
        # pl.Buffered(1) not supported by this jax/Mosaic version -> fall back to
        # default double-buffered (still VMEM-resident) weights.
        return _forward_impl(query, w1_p, b1_p, w2_p, b2_p,
                             tm=tm, single_buffer_weights=False)


def _init_params(key, dim):
    """Deterministic init mimicking nn.Linear default (uniform +- 1/sqrt(fan_in))."""
    k1, k2, k3, k4 = jax.random.split(key, 4)
    bound = 1.0 / (dim ** 0.5)
    # PyTorch stores Linear weight as [out, in]; generate then transpose to [in, out].
    w1_t = jax.random.uniform(k1, (dim, dim), jnp.float32, -bound, bound).T
    b1 = jax.random.uniform(k2, (dim,), jnp.float32, -bound, bound)
    w2_t = jax.random.uniform(k3, (dim, dim), jnp.float32, -bound, bound).T
    b2 = jax.random.uniform(k4, (dim,), jnp.float32, -bound, bound)
    return w1_t, b1, w2_t, b2


if __name__ == "__main__":
    # TODO(synk): the training-time memory update (autograd MSE grads, momentum,
    #             forget gates alpha/eta/theta) and the surrounding TitansMAL
    #             attention/FFN/LayerNorm stack are out of scope; only the
    #             memory-network forward (LongTermMemory inference output) is ported.
    dim = 32
    batch, seq = 2, 8

    key = jax.random.PRNGKey(0)
    k_params, k_query = jax.random.split(key)

    w1, b1, w2, b2 = _init_params(k_params, dim)
    query = jax.random.normal(k_query, (batch, seq, dim), jnp.float32)

    params = prepare_memory_params(w1, b1, w2, b2)      # one-time pad + bf16 cast
    out = long_term_memory_forward(query, *params)
    out = jax.block_until_ready(out)

    # Pure-JAX f32 reference of the same math.  The kernel uses bf16 MXU operands
    # (f32 accumulation) and emits bf16, so compare with a loosened tolerance.
    x = query.reshape(-1, dim)
    h = x @ w1 + b1
    h = h * jax.nn.sigmoid(h)
    ref = (h @ w2 + b2).reshape(batch, seq, dim)
    assert out.shape == ref.shape
    assert jnp.allclose(out, ref, atol=5e-2, rtol=5e-2), "mismatch vs reference"

    print("KERNEL_OK")
</pallas_src>

<mosaic_0001>
module attributes {stable_mosaic.version = 11 : i64} {
  func.func @_memory_net_kernel(%arg0: i32, %arg1: memref<128x128xbf16, #tpu.memory_space<vmem>>, %arg2: memref<128x128xbf16, #tpu.memory_space<vmem>>, %arg3: memref<1x128xf32, #tpu.memory_space<vmem>>, %arg4: memref<128x128xbf16, #tpu.memory_space<vmem>>, %arg5: memref<1x128xf32, #tpu.memory_space<vmem>>, %arg6: memref<128x128xbf16, #tpu.memory_space<vmem>>) attributes {dimension_semantics = [#tpu.dimension_semantics<parallel>], iteration_bounds = array<i64: 1>, scalar_prefetch = 0 : i64, scratch_operands = 0 : i64, tpu.core_type = #tpu.core_type<tc>, window_params = [{transform_indices = @transform_0, window_bounds = array<i64: 128, 128>}, {pipeline_mode = #tpu.pipeline_mode<synchronous>, transform_indices = @transform_1, window_bounds = array<i64: 128, 128>}, {pipeline_mode = #tpu.pipeline_mode<synchronous>, transform_indices = @transform_2, window_bounds = array<i64: 1, 128>}, {pipeline_mode = #tpu.pipeline_mode<synchronous>, transform_indices = @transform_3, window_bounds = array<i64: 128, 128>}, {pipeline_mode = #tpu.pipeline_mode<synchronous>, transform_indices = @transform_4, window_bounds = array<i64: 1, 128>}, {transform_indices = @transform_5, window_bounds = array<i64: 128, 128>}]} {
    %c0 = arith.constant 0 : index
    %c0_0 = arith.constant 0 : index
    %0 = vector.load %arg1[%c0, %c0_0] : memref<128x128xbf16, #tpu.memory_space<vmem>>, vector<128x128xbf16>
    %c0_1 = arith.constant 0 : index
    %c0_2 = arith.constant 0 : index
    %1 = vector.load %arg2[%c0_1, %c0_2] : memref<128x128xbf16, #tpu.memory_space<vmem>>, vector<128x128xbf16>
    %cst = arith.constant dense<0.000000e+00> : vector<128x128xf32>
    %2 = tpu.matmul %0, %1, %cst {dimension_numbers = #tpu.dot_dimension_numbers<[1], [0], [0], [1], [0, 0, 1, 1], [], []>} : vector<128x128xbf16>, vector<128x128xbf16>, vector<128x128xf32> -> vector<128x128xf32>
    %c0_3 = arith.constant 0 : index
    %c0_4 = arith.constant 0 : index
    %3 = vector.load %arg3[%c0_3, %c0_4] : memref<1x128xf32, #tpu.memory_space<vmem>>, vector<1x128xf32>
    %4 = vector.broadcast %3 : vector<1x128xf32> to vector<128x128xf32>
    %5 = arith.addf %2, %4 : vector<128x128xf32>
    %6 = arith.negf %5 : vector<128x128xf32>
    %7 = math.exp %6 : vector<128x128xf32>
    %cst_5 = arith.constant 1.000000e+00 : f32
    %8 = vector.broadcast %cst_5 : f32 to vector<128x128xf32>
    %9 = arith.addf %8, %7 : vector<128x128xf32>
    %10 = arith.divf %8, %9 : vector<128x128xf32>
    %11 = arith.mulf %5, %10 : vector<128x128xf32>
    %12 = arith.truncf %11 : vector<128x128xf32> to vector<128x128xbf16>
    %c0_6 = arith.constant 0 : index
    %c0_7 = arith.constant 0 : index
    %13 = vector.load %arg4[%c0_6, %c0_7] : memref<128x128xbf16, #tpu.memory_space<vmem>>, vector<128x128xbf16>
    %cst_8 = arith.constant dense<0.000000e+00> : vector<128x128xf32>
    %14 = tpu.matmul %12, %13, %cst_8 {dimension_numbers = #tpu.dot_dimension_numbers<[1], [0], [0], [1], [0, 0, 1, 1], [], []>} : vector<128x128xbf16>, vector<128x128xbf16>, vector<128x128xf32> -> vector<128x128xf32>
    %c0_9 = arith.constant 0 : index
    %c0_10 = arith.constant 0 : index
    %15 = vector.load %arg5[%c0_9, %c0_10] : memref<1x128xf32, #tpu.memory_space<vmem>>, vector<1x128xf32>
    %16 = vector.broadcast %15 : vector<1x128xf32> to vector<128x128xf32>
    %17 = arith.addf %14, %16 : vector<128x128xf32>
    %18 = arith.truncf %17 : vector<128x128xf32> to vector<128x128xbf16>
    %c0_11 = arith.constant 0 : index
    %c0_12 = arith.constant 0 : index
    %19 = vector.load %arg6[%c0_11, %c0_12] : memref<128x128xbf16, #tpu.memory_space<vmem>>, vector<128x128xbf16>
    tpu.vector_store %arg6[%c0_11, %c0_12], %18 {strides = array<i32>} : memref<128x128xbf16, #tpu.memory_space<vmem>>, vector<128x128xbf16>,
    return
  }
  func.func @transform_0(%arg0: i32) -> (i32, i32) {
    %c0_i32 = arith.constant 0 : i32
    %c0_i32_0 = arith.constant 0 : i32
    return %arg0, %c0_i32 : i32, i32
  }
  func.func @transform_1(%arg0: i32) -> (i32, i32) {
    %c0_i32 = arith.constant 0 : i32
    %c0_i32_0 = arith.constant 0 : i32
    %c0_i32_1 = arith.constant 0 : i32
    return %c0_i32, %c0_i32_0 : i32, i32
  }
  func.func @transform_2(%arg0: i32) -> (i32, i32) {
    %c0_i32 = arith.constant 0 : i32
    %c0_i32_0 = arith.constant 0 : i32
    %c0_i32_1 = arith.constant 0 : i32
    return %c0_i32, %c0_i32_0 : i32, i32
  }
  func.func @transform_3(%arg0: i32) -> (i32, i32) {
    %c0_i32 = arith.constant 0 : i32
    %c0_i32_0 = arith.constant 0 : i32
    %c0_i32_1 = arith.constant 0 : i32
    return %c0_i32, %c0_i32_0 : i32, i32
  }
  func.func @transform_4(%arg0: i32) -> (i32, i32) {
    %c0_i32 = arith.constant 0 : i32
    %c0_i32_0 = arith.constant 0 : i32
    %c0_i32_1 = arith.constant 0 : i32
    return %c0_i32, %c0_i32_0 : i32, i32
  }
  func.func @transform_5(%arg0: i32) -> (i32, i32) {
    %c0_i32 = arith.constant 0 : i32
    %c0_i32_0 = arith.constant 0 : i32
    return %arg0, %c0_i32 : i32, i32
  }
}

module attributes {stable_mosaic.version = 11 : i64} {
  func.func @_memory_net_kernel(%arg0: i32, %arg1: memref<128x128xbf16, #tpu.memory_space<vmem>>, %arg2: memref<128x128xbf16, #tpu.memory_space<vmem>>, %arg3: memref<1x128xf32, #tpu.memory_space<vmem>>, %arg4: memref<128x128xbf16, #tpu.memory_space<vmem>>, %arg5: memref<1x128xf32, #tpu.memory_space<vmem>>, %arg6: memref<128x128xbf16, #tpu.memory_space<vmem>>) attributes {dimension_semantics = [#tpu.dimension_semantics<parallel>], iteration_bounds = array<i64: 1>, scalar_prefetch = 0 : i64, scratch_operands = 0 : i64, tpu.core_type = #tpu.core_type<tc>, window_params = [{transform_indices = @transform_0, window_bounds = array<i64: 128, 128>}, {pipeline_mode = #tpu.pipeline_mode<synchronous>, transform_indices = @transform_1, window_bounds = array<i64: 128, 128>}, {pipeline_mode = #tpu.pipeline_mode<synchronous>, transform_indices = @transform_2, window_bounds = array<i64: 1, 128>}, {pipeline_mode = #tpu.pipeline_mode<synchronous>, transform_indices = @transform_3, window_bounds = array<i64: 128, 128>}, {pipeline_mode = #tpu.pipeline_mode<synchronous>, transform_indices = @transform_4, window_bounds = array<i64: 1, 128>}, {transform_indices = @transform_5, window_bounds = array<i64: 128, 128>}]} {
    %c0 = arith.constant 0 : index
    %c0_0 = arith.constant 0 : index
    %0 = vector.load %arg1[%c0, %c0_0] : memref<128x128xbf16, #tpu.memory_space<vmem>>, vector<128x128xbf16>
    %c0_1 = arith.constant 0 : index
    %c0_2 = arith.constant 0 : index
    %1 = vector.load %arg2[%c0_1, %c0_2] : memref<128x128xbf16, #tpu.memory_space<vmem>>, vector<128x128xbf16>
    %cst = arith.constant dense<0.000000e+00> : vector<128x128xf32>
    %2 = tpu.matmul %0, %1, %cst {dimension_numbers = #tpu.dot_dimension_numbers<[1], [0], [0], [1], [0, 0, 1, 1], [], []>} : vector<128x128xbf16>, vector<128x128xbf16>, vector<128x128xf32> -> vector<128x128xf32>
    %c0_3 = arith.constant 0 : index
    %c0_4 = arith.constant 0 : index
    %3 = vector.load %arg3[%c0_3, %c0_4] : memref<1x128xf32, #tpu.memory_space<vmem>>, vector<1x128xf32>
    %4 = vector.broadcast %3 : vector<1x128xf32> to vector<128x128xf32>
    %5 = arith.addf %2, %4 : vector<128x128xf32>
    %6 = arith.negf %5 : vector<128x128xf32>
    %7 = math.exp %6 : vector<128x128xf32>
    %cst_5 = arith.constant 1.000000e+00 : f32
    %8 = vector.broadcast %cst_5 : f32 to vector<128x128xf32>
    %9 = arith.addf %8, %7 : vector<128x128xf32>
    %10 = arith.divf %8, %9 : vector<128x128xf32>
    %11 = arith.mulf %5, %10 : vector<128x128xf32>
    %12 = arith.truncf %11 : vector<128x128xf32> to vector<128x128xbf16>
    %c0_6 = arith.constant 0 : index
    %c0_7 = arith.constant 0 : index
    %13 = vector.load %arg4[%c0_6, %c0_7] : memref<128x128xbf16, #tpu.memory_space<vmem>>, vector<128x128xbf16>
    %cst_8 = arith.constant dense<0.000000e+00> : vector<128x128xf32>
    %14 = tpu.matmul %12, %13, %cst_8 {dimension_numbers = #tpu.dot_dimension_numbers<[1], [0], [0], [1], [0, 0, 1, 1], [], []>} : vector<128x128xbf16>, vector<128x128xbf16>, vector<128x128xf32> -> vector<128x128xf32>
    %c0_9 = arith.constant 0 : index
    %c0_10 = arith.constant 0 : index
    %15 = vector.load %arg5[%c0_9, %c0_10] : memref<1x128xf32, #tpu.memory_space<vmem>>, vector<1x128xf32>
    %16 = vector.broadcast %15 : vector<1x128xf32> to vector<128x128xf32>
    %17 = arith.addf %14, %16 : vector<128x128xf32>
    %18 = arith.truncf %17 : vector<128x128xf32> to vector<128x128xbf16>
    %c0_11 = arith.constant 0 : index
    %c0_12 = arith.constant 0 : index
    %19 = vector.load %arg6[%c0_11, %c0_12] : memref<128x128xbf16, #tpu.memory_space<vmem>>, vector<128x128xbf16>
    tpu.vector_store %arg6[%c0_11, %c0_12], %18 {strides = array<i32>} : memref<128x128xbf16, #tpu.memory_space<vmem>>, vector<128x128xbf16>,
    return
  }
  func.func @transform_0(%arg0: i32) -> (i32, i32) {
    %c0_i32 = arith.constant 0 : i32
    %c0_i32_0 = arith.constant 0 : i32
    return %arg0, %c0_i32 : i32, i32
  }
  func.func @transform_1(%arg0: i32) -> (i32, i32) {
    %c0_i32 = arith.constant 0 : i32
    %c0_i32_0 = arith.constant 0 : i32
    %c0_i32_1 = arith.constant 0 : i32
    return %c0_i32, %c0_i32_0 : i32, i32
  }
  func.func @transform_2(%arg0: i32) -> (i32, i32) {
    %c0_i32 = arith.constant 0 : i32
    %c0_i32_0 = arith.constant 0 : i32
    %c0_i32_1 = arith.constant 0 : i32
    return %c0_i32, %c0_i32_0 : i32, i32
  }
  func.func @transform_3(%arg0: i32) -> (i32, i32) {
    %c0_i32 = arith.constant 0 : i32
    %c0_i32_0 = arith.constant 0 : i32
    %c0_i32_1 = arith.constant 0 : i32
    return %c0_i32, %c0_i32_0 : i32, i32
  }
  func.func @transform_4(%arg0: i32) -> (i32, i32) {
    %c0_i32 = arith.constant 0 : i32
    %c0_i32_0 = arith.constant 0 : i32
    %c0_i32_1 = arith.constant 0 : i32
    return %c0_i32, %c0_i32_0 : i32, i32
  }
  func.func @transform_5(%arg0: i32) -> (i32, i32) {
    %c0_i32 = arith.constant 0 : i32
    %c0_i32_0 = arith.constant 0 : i32
    return %arg0, %c0_i32 : i32, i32
  }
}

</mosaic_0001>

<llo_original>
// kernel: _forward_impl.1
$region0: #{_forward_impl.1}
  #allocation0 [shape = 'u32[]', space=smem, size = 0x4, offset = 0x4, fixed_abs, tag = 'smem constant byte address 0x4 - core index']
  #allocation1 [shape = 'u32[144,128]{1,0:T(1,128)}', space=vmem, size = 0x12000, scoped, tag = 'internal scratch']
  %s0 = inlined_call_operand.vmem [shape: bf16[128,128], index: 0, kind: input, shape index: {}]
  %s1 = inlined_call_operand.vmem [shape: bf16[128,128], index: 1, kind: input, shape index: {}]
  %s2 = inlined_call_operand.vmem [shape: f32[1,128], index: 2, kind: input, shape index: {}]
  %s3 = inlined_call_operand.hbm [shape: bf16[128,128], index: 3, kind: input, shape index: {}]
  %s4 = inlined_call_operand.vmem [shape: f32[1,128], index: 4, kind: input, shape index: {}]
  %s5 = inlined_call_operand.vmem [shape: bf16[128,128], index: 5, kind: output, shape index: {}]
  %s6 = sld [smem:[#allocation0]]
  $region34: #{_forward_impl.1} parent=0
    _
  %s8 = ssub.s32 1, %s6
  %s9 = scalar_select 0, %s8, %s6
  $region1: #{_forward_impl.1} parent=0
    #allocation2 [shape = 'u8[32768]{0}', space=vmem, size = 0x8000, scoped, tag = 'input window, operand 3, single buffered']
    #allocation3 [shape = 's32[1]{0}', space=sflag, size = 0x4, scoped, tag = 'scoped memory for _forward_impl.1']
    %10 = vsyncpa [#allocation3], 0
    // Predicated region
    $region2: #{_forward_impl.1} parent=1 // pred_check
      _
    $region3: #{_forward_impl.1} parent=1 // pred_check_branch
      %12 = sbr.rel (0) target = $region5
    $region4: #{_forward_impl.1} parent=1 // pred_region
      _
    $region5: #{_forward_impl.1} parent=1 // pred_fallthru
      _
    // Predicated region
    $region6: #{_forward_impl.1} parent=1 // pred_check
      _
    $region7: #{_forward_impl.1} parent=1 // pred_check_branch
      %14 = sbr.rel (0) target = $region9
    $region8: #{_forward_impl.1} parent=1 // pred_region
      _
    $region9: #{_forward_impl.1} parent=1 // pred_fallthru
      _
    // Predicated region
    $region10: #{_forward_impl.1} parent=1 // pred_check
      _
    $region11: #{_forward_impl.1} parent=1 // pred_check_branch
      %16 = sbr.rel (0) target = $region13
    $region12: #{_forward_impl.1} parent=1 // pred_region
      _
    $region13: #{_forward_impl.1} parent=1 // pred_fallthru
      _
    // Predicated region
    $region14: #{_forward_impl.1} parent=1 // pred_check
      _
    $region15: #{_forward_impl.1} parent=1 // pred_check_branch
      %18 = sbr.rel (0) target = $region17
    $region16: #{_forward_impl.1} parent=1 // pred_region
      %s20 = ssub.s32 1024, 1024
      %21 = vsyncadd [#allocation3], %s20
      %s22 = sshll.u32 [#allocation2], 4
      %s23 = int_to_ptr.vmem [resolvable:$true] %s22
      %28 = dma.hbm_to_vmem [thread:$0]  %s3, 1024, %s23, [#allocation3], 64, 64, 4
    $region17: #{_forward_impl.1} parent=1 // pred_fallthru
      _
    // Predicated region
    $region18: #{_forward_impl.1} parent=1 // pred_check
      _
    $region19: #{_forward_impl.1} parent=1 // pred_check_branch
      %30 = sbr.rel (0) target = $region21
    $region20: #{_forward_impl.1} parent=1 // pred_region
      _
    $region21: #{_forward_impl.1} parent=1 // pred_fallthru
      _
    // Predicated region
    $region22: #{_forward_impl.1} parent=1 // pred_check
      _
    $region23: #{_forward_impl.1} parent=1 // pred_check_branch
      %32 = sbr.rel (0) target = $region25
    $region24: #{_forward_impl.1} parent=1 // pred_region
      %33 = dma.done [#allocation3], 1024
    $region25: #{_forward_impl.1} parent=1 // pred_fallthru
      _
    %v35 = vld [vmem:[%s0] sm:$0xf]
    %v36 = vld [vmem:[%s0 + $0x4] sm:$0xf]
    %v37 = vld [vmem:[%s0 + $0x8] sm:$0xf]
    %v38 = vld [vmem:[%s0 + $0xc] sm:$0xf]
    %v39 = vld [vmem:[%s0 + $0x10] sm:$0xf]
    %v40 = vld [vmem:[%s0 + $0x14] sm:$0xf]
    %v41 = vld [vmem:[%s0 + $0x18] sm:$0xf]
    %v42 = vld [vmem:[%s0 + $0x1c] sm:$0xf]
    %v43 = vld [vmem:[%s0 + $0x20] sm:$0xf]
    %v44 = vld [vmem:[%s0 + $0x24] sm:$0xf]
    %v45 = vld [vmem:[%s0 + $0x28] sm:$0xf]
    %v46 = vld [vmem:[%s0 + $0x2c] sm:$0xf]
    %v47 = vld [vmem:[%s0 + $0x30] sm:$0xf]
    %v48 = vld [vmem:[%s0 + $0x34] sm:$0xf]
    %v49 = vld [vmem:[%s0 + $0x38] sm:$0xf]
    %v50 = vld [vmem:[%s0 + $0x3c] sm:$0xf]
    %v51 = vld [vmem:[%s1] sm:$0xf]
    %v52 = vld [vmem:[%s1 + $0x4] sm:$0xf]
    %v53 = vld [vmem:[%s1 + $0x8] sm:$0xf]
    %v54 = vld [vmem:[%s1 + $0xc] sm:$0xf]
    %v55 = vld [vmem:[%s1 + $0x10] sm:$0xf]
    %v56 = vld [vmem:[%s1 + $0x14] sm:$0xf]
    %v57 = vld [vmem:[%s1 + $0x18] sm:$0xf]
    %v58 = vld [vmem:[%s1 + $0x1c] sm:$0xf]
    %v59 = vld [vmem:[%s1 + $0x20] sm:$0xf]
    %v60 = vld [vmem:[%s1 + $0x24] sm:$0xf]
    %v61 = vld [vmem:[%s1 + $0x28] sm:$0xf]
    %v62 = vld [vmem:[%s1 + $0x2c] sm:$0xf]
    %v63 = vld [vmem:[%s1 + $0x30] sm:$0xf]
    %v64 = vld [vmem:[%s1 + $0x34] sm:$0xf]
    %v65 = vld [vmem:[%s1 + $0x38] sm:$0xf]
    %v66 = vld [vmem:[%s1 + $0x3c] sm:$0xf]
    %v67 = vld [vmem:[%s2] sm:$0x1]
    %v69 = vlaneseq
    %v70 = vshrl.u32 %v69, 7
    %v71 = vsub.s32 0, %v70
    %v72 = vrot.slane %v67, %v71
    %v90 = vunpack.c.l.b16 %v35
    %v91 = vunpack.c.l.b16 %v36
    %v92 = vunpack.c.l.b16 %v37
    %v93 = vunpack.c.l.b16 %v38
    %v94 = vunpack.c.l.b16 %v39
    %v95 = vunpack.c.l.b16 %v40
    %v96 = vunpack.c.l.b16 %v41
    %v97 = vunpack.c.l.b16 %v42
    %v98 = vunpack.c.l.b16 %v43
    %v99 = vunpack.c.l.b16 %v44
    %v100 = vunpack.c.l.b16 %v45
    %v101 = vunpack.c.l.b16 %v46
    %v102 = vunpack.c.l.b16 %v47
    %v103 = vunpack.c.l.b16 %v48
    %v104 = vunpack.c.l.b16 %v49
    %v105 = vunpack.c.l.b16 %v50
    %v106 = vpack.c.b16 %v91, %v90
    %v107 = vpack.c.b16 %v93, %v92
    %v108 = vpack.c.b16 %v95, %v94
    %v109 = vpack.c.b16 %v97, %v96
    %v110 = vpack.c.b16 %v99, %v98
    %v111 = vpack.c.b16 %v101, %v100
    %v112 = vpack.c.b16 %v103, %v102
    %v113 = vpack.c.b16 %v105, %v104
    %v138 = vunpack.c.l.b16 %v51
    %v139 = vunpack.c.l.b16 %v52
    %v140 = vunpack.c.l.b16 %v53
    %v141 = vunpack.c.l.b16 %v54
    %v142 = vunpack.c.l.b16 %v55
    %v143 = vunpack.c.l.b16 %v56
    %v144 = vunpack.c.l.b16 %v57
    %v145 = vunpack.c.l.b16 %v58
    %v146 = vunpack.c.l.b16 %v59
    %v147 = vunpack.c.l.b16 %v60
    %v148 = vunpack.c.l.b16 %v61
    %v149 = vunpack.c.l.b16 %v62
    %v150 = vunpack.c.l.b16 %v63
    %v151 = vunpack.c.l.b16 %v64
    %v152 = vunpack.c.l.b16 %v65
    %v153 = vunpack.c.l.b16 %v66
    %v154 = vpack.c.b16 %v139, %v138
    %v155 = vpack.c.b16 %v141, %v140
    %v156 = vpack.c.b16 %v143, %v142
    %v157 = vpack.c.b16 %v145, %v144
    %v158 = vpack.c.b16 %v147, %v146
    %v159 = vpack.c.b16 %v149, %v148
    %v160 = vpack.c.b16 %v151, %v150
    %v161 = vpack.c.b16 %v153, %v152
    %170 = vmatprep.subr.bf16.mxu0 0
    %171 = vmatpush1.bf16.msra.mxu0 %v154
    %172 = vmatprep.subr.bf16.mxu0 0
    %173 = vmatpush1.bf16.msra.mxu0 %v155
    %174 = vmatprep.subr.bf16.mxu0 0
    %175 = vmatpush1.bf16.msra.mxu0 %v156
    %176 = vmatprep.subr.bf16.mxu0 0
    %177 = vmatpush1.bf16.msra.mxu0 %v157
    %178 = vmatprep.subr.bf16.mxu0 0
    %179 = vmatpush1.bf16.msra.mxu0 %v158
    %180 = vmatprep.subr.bf16.mxu0 0
    %181 = vmatpush1.bf16.msra.mxu0 %v159
    %182 = vmatprep.subr.bf16.mxu0 0
    %183 = vmatpush1.bf16.msra.mxu0 %v160
    %184 = vmatprep.subr.bf16.mxu0 0
    %185 = vmatpush1.bf16.msra.mxu0 %v161
    %186 = vmatprep.subr.bf16.mxu0 0
    %187 = vmatpush1.bf16.msra.mxu0 0
    %188 = vmatprep.subr.bf16.mxu0 0
    %189 = vmatpush1.bf16.msra.mxu0 0
    %190 = vmatprep.subr.bf16.mxu0 0
    %191 = vmatpush1.bf16.msra.mxu0 0
    %192 = vmatprep.subr.bf16.mxu0 0
    %193 = vmatpush1.bf16.msra.mxu0 0
    %194 = vmatprep.subr.bf16.mxu0 0
    %195 = vmatpush1.bf16.msra.mxu0 0
    %196 = vmatprep.subr.bf16.mxu0 0
    %197 = vmatpush1.bf16.msra.mxu0 0
    %198 = vmatprep.subr.bf16.mxu0 0
    %199 = vmatpush1.bf16.msra.mxu0 0
    %200 = vmatprep.subr.bf16.mxu0 0
    %201 = vmatpush1.bf16.msra.mxu0 0
    %202 = vmatprep.mubr.bf16.mxu0 0
    %203 = vmatmul.mubr.bf16.gmra.mrb[0].mxu0 %v106
    %v204 = vpop.f32.mrb[0].mxu0
    %v205 = vadd.f32 %v72, %v204
    %v206 = vpop.f32.mrb[0].mxu0
    %v207 = vpop.f32.mrb[0].mxu0
    %v208 = vadd.f32 %v72, %v207
    %v209 = vpop.f32.mrb[0].mxu0
    %210 = vmatprep.mubr.bf16.mxu0 0
    %211 = vmatmul.mubr.bf16.gmra.mrb[0].mxu0 %v107
    %v212 = vpop.f32.mrb[0].mxu0
    %v213 = vadd.f32 %v72, %v212
    %v214 = vpop.f32.mrb[0].mxu0
    %v215 = vpop.f32.mrb[0].mxu0
    %v216 = vadd.f32 %v72, %v215
    %v217 = vpop.f32.mrb[0].mxu0
    %218 = vmatprep.mubr.bf16.mxu0 0
    %219 = vmatmul.mubr.bf16.gmra.mrb[0].mxu0 %v108
    %v220 = vpop.f32.mrb[0].mxu0
    %v221 = vadd.f32 %v72, %v220
    %v222 = vpop.f32.mrb[0].mxu0
    %v223 = vpop.f32.mrb[0].mxu0
    %v224 = vadd.f32 %v72, %v223
    %v225 = vpop.f32.mrb[0].mxu0
    %226 = vmatprep.mubr.bf16.mxu0 0
    %227 = vmatmul.mubr.bf16.gmra.mrb[0].mxu0 %v109
    %v228 = vpop.f32.mrb[0].mxu0
    %v229 = vadd.f32 %v72, %v228
    %v230 = vpop.f32.mrb[0].mxu0
    %v231 = vpop.f32.mrb[0].mxu0
    %v232 = vadd.f32 %v72, %v231
    %v233 = vpop.f32.mrb[0].mxu0
    %234 = vmatprep.mubr.bf16.mxu0 0
    %235 = vmatmul.mubr.bf16.gmra.mrb[0].mxu0 %v110
    %v236 = vpop.f32.mrb[0].mxu0
    %v237 = vadd.f32 %v72, %v236
    %v238 = vpop.f32.mrb[0].mxu0
    %v239 = vpop.f32.mrb[0].mxu0
    %v240 = vadd.f32 %v72, %v239
    %v241 = vpop.f32.mrb[0].mxu0
    %242 = vmatprep.mubr.bf16.mxu0 0
    %243 = vmatmul.mubr.bf16.gmra.mrb[0].mxu0 %v111
    %v244 = vpop.f32.mrb[0].mxu0
    %v245 = vadd.f32 %v72, %v244
    %v246 = vpop.f32.mrb[0].mxu0
    %v247 = vpop.f32.mrb[0].mxu0
    %v248 = vadd.f32 %v72, %v247
    %v249 = vpop.f32.mrb[0].mxu0
    %250 = vmatprep.mubr.bf16.mxu0 0
    %251 = vmatmul.mubr.bf16.gmra.mrb[0].mxu0 %v112
    %v252 = vpop.f32.mrb[0].mxu0
    %v253 = vadd.f32 %v72, %v252
    %v254 = vpop.f32.mrb[0].mxu0
    %v255 = vpop.f32.mrb[0].mxu0
    %v256 = vadd.f32 %v72, %v255
    %v257 = vpop.f32.mrb[0].mxu0
    %258 = vmatprep.mubr.bf16.mxu0 0
    %259 = vmatmul.mubr.bf16.gmra.mrb[0].mxu0 %v113
    %v260 = vpop.f32.mrb[0].mxu0
    %v261 = vadd.f32 %v72, %v260
    %v262 = vpop.f32.mrb[0].mxu0
    %v263 = vpop.f32.mrb[0].mxu0
    %v264 = vadd.f32 %v72, %v263
    %v265 = vpop.f32.mrb[0].mxu0
    %266 = vdwg.mxu0
    %v267 = vxor.u32 %v205, 2147483648
    %v268 = vxor.u32 %v208, 2147483648
    %v269 = vxor.u32 %v213, 2147483648
    %v270 = vxor.u32 %v216, 2147483648
    %v271 = vxor.u32 %v221, 2147483648
    %v272 = vxor.u32 %v224, 2147483648
    %v273 = vxor.u32 %v229, 2147483648
    %v274 = vxor.u32 %v232, 2147483648
    %v275 = vxor.u32 %v237, 2147483648
    %v276 = vxor.u32 %v240, 2147483648
    %v277 = vxor.u32 %v245, 2147483648
    %v278 = vxor.u32 %v248, 2147483648
    %v279 = vxor.u32 %v253, 2147483648
    %v280 = vxor.u32 %v256, 2147483648
    %v281 = vxor.u32 %v261, 2147483648
    %v282 = vxor.u32 %v264, 2147483648
    %v283 = vmul.f32 %v267, 1.442695
    %v284 = vpow.pop %v283
    %v285 = vmul.f32 %v268, 1.442695
    %v286 = vpow.pop %v285
    %v287 = vmul.f32 %v269, 1.442695
    %v288 = vpow.pop %v287
    %v289 = vmul.f32 %v270, 1.442695
    %v290 = vpow.pop %v289
    %v291 = vmul.f32 %v271, 1.442695
    %v292 = vpow.pop %v291
    %v293 = vmul.f32 %v272, 1.442695
    %v294 = vpow.pop %v293
    %v295 = vmul.f32 %v273, 1.442695
    %v296 = vpow.pop %v295
    %v297 = vmul.f32 %v274, 1.442695
    %v298 = vpow.pop %v297
    %v299 = vmul.f32 %v275, 1.442695
    %v300 = vpow.pop %v299
    %v301 = vmul.f32 %v276, 1.442695
    %v302 = vpow.pop %v301
    %v303 = vmul.f32 %v277, 1.442695
    %v304 = vpow.pop %v303
    %v305 = vmul.f32 %v278, 1.442695
    %v306 = vpow.pop %v305
    %v307 = vmul.f32 %v279, 1.442695
    %v308 = vpow.pop %v307
    %v309 = vmul.f32 %v280, 1.442695
    %v310 = vpow.pop %v309
    %v311 = vmul.f32 %v281, 1.442695
    %v312 = vpow.pop %v311
    %v313 = vmul.f32 %v282, 1.442695
    %v314 = vpow.pop %v313
    %v315 = vadd.f32 %v284, 1.0
    %v316 = vadd.f32 %v286, 1.0
    %v317 = vadd.f32 %v288, 1.0
    %v318 = vadd.f32 %v290, 1.0
    %v319 = vadd.f32 %v292, 1.0
    %v320 = vadd.f32 %v294, 1.0
    %v321 = vadd.f32 %v296, 1.0
    %v322 = vadd.f32 %v298, 1.0
    %v323 = vadd.f32 %v300, 1.0
    %v324 = vadd.f32 %v302, 1.0
    %v325 = vadd.f32 %v304, 1.0
    %v326 = vadd.f32 %v306, 1.0
    %v327 = vadd.f32 %v308, 1.0
    %v328 = vadd.f32 %v310, 1.0
    %v329 = vadd.f32 %v312, 1.0
    %v330 = vadd.f32 %v314, 1.0
    %v331 = vrcp.pop %v315
    %v332 = vmul.f32 1.0, %v331
    %v333 = vrcp.pop %v316
    %v334 = vmul.f32 1.0, %v333
    %v335 = vrcp.pop %v317
    %v336 = vmul.f32 1.0, %v335
    %v337 = vrcp.pop %v318
    %v338 = vmul.f32 1.0, %v337
    %v339 = vrcp.pop %v319
    %v340 = vmul.f32 1.0, %v339
    %v341 = vrcp.pop %v320
    %v342 = vmul.f32 1.0, %v341
    %v343 = vrcp.pop %v321
    %v344 = vmul.f32 1.0, %v343
    %v345 = vrcp.pop %v322
    %v346 = vmul.f32 1.0, %v345
    %v347 = vrcp.pop %v323
    %v348 = vmul.f32 1.0, %v347
    %v349 = vrcp.pop %v324
    %v350 = vmul.f32 1.0, %v349
    %v351 = vrcp.pop %v325
    %v352 = vmul.f32 1.0, %v351
    %v353 = vrcp.pop %v326
    %v354 = vmul.f32 1.0, %v353
    %v355 = vrcp.pop %v327
    %v356 = vmul.f32 1.0, %v355
    %v357 = vrcp.pop %v328
    %v358 = vmul.f32 1.0, %v357
    %v359 = vrcp.pop %v329
    %v360 = vmul.f32 1.0, %v359
    %v361 = vrcp.pop %v330
    %v362 = vmul.f32 1.0, %v361
    %v363 = vmul.f32 %v205, %v332
    %v364 = vmul.f32 %v208, %v334
    %v365 = vmul.f32 %v213, %v336
    %v366 = vmul.f32 %v216, %v338
    %v367 = vmul.f32 %v221, %v340
    %v368 = vmul.f32 %v224, %v342
    %v369 = vmul.f32 %v229, %v344
    %v370 = vmul.f32 %v232, %v346
    %v371 = vmul.f32 %v237, %v348
    %v372 = vmul.f32 %v240, %v350
    %v373 = vmul.f32 %v245, %v352
    %v374 = vmul.f32 %v248, %v354
    %v375 = vmul.f32 %v253, %v356
    %v376 = vmul.f32 %v256, %v358
    %v377 = vmul.f32 %v261, %v360
    %v378 = vmul.f32 %v264, %v362
    %v379 = vpack.c.bf16 %v364, %v363
    %v380 = vpack.c.bf16 %v366, %v365
    %v381 = vpack.c.bf16 %v368, %v367
    %v382 = vpack.c.bf16 %v370, %v369
    %v383 = vpack.c.bf16 %v372, %v371
    %v384 = vpack.c.bf16 %v374, %v373
    %v385 = vpack.c.bf16 %v376, %v375
    %v386 = vpack.c.bf16 %v378, %v377
    %v387 = vld [vmem:[#allocation2] sm:$0xf]
    %v388 = vld [vmem:[#allocation2 + $0x4] sm:$0xf]
    %v389 = vld [vmem:[#allocation2 + $0x8] sm:$0xf]
    %v390 = vld [vmem:[#allocation2 + $0xc] sm:$0xf]
    %v391 = vld [vmem:[#allocation2 + $0x10] sm:$0xf]
    %v392 = vld [vmem:[#allocation2 + $0x14] sm:$0xf]
    %v393 = vld [vmem:[#allocation2 + $0x18] sm:$0xf]
    %v394 = vld [vmem:[#allocation2 + $0x1c] sm:$0xf]
    %v395 = vld [vmem:[#allocation2 + $0x20] sm:$0xf]
    %v396 = vld [vmem:[#allocation2 + $0x24] sm:$0xf]
    %v397 = vld [vmem:[#allocation2 + $0x28] sm:$0xf]
    %v398 = vld [vmem:[#allocation2 + $0x2c] sm:$0xf]
    %v399 = vld [vmem:[#allocation2 + $0x30] sm:$0xf]
    %v400 = vld [vmem:[#allocation2 + $0x34] sm:$0xf]
    %v401 = vld [vmem:[#allocation2 + $0x38] sm:$0xf]
    %v402 = vld [vmem:[#allocation2 + $0x3c] sm:$0xf]
    %v403 = vld [vmem:[%s4] sm:$0x1]
    %v405 = vlaneseq
    %v406 = vshrl.u32 %v405, 7
    %v407 = vsub.s32 0, %v406
    %v408 = vrot.slane %v403, %v407
    %v426 = vunpack.c.l.b16 %v387
    %v427 = vunpack.c.l.b16 %v388
    %v428 = vunpack.c.l.b16 %v389
    %v429 = vunpack.c.l.b16 %v390
    %v430 = vunpack.c.l.b16 %v391
    %v431 = vunpack.c.l.b16 %v392
    %v432 = vunpack.c.l.b16 %v393
    %v433 = vunpack.c.l.b16 %v394
    %v434 = vunpack.c.l.b16 %v395
    %v435 = vunpack.c.l.b16 %v396
    %v436 = vunpack.c.l.b16 %v397
    %v437 = vunpack.c.l.b16 %v398
    %v438 = vunpack.c.l.b16 %v399
    %v439 = vunpack.c.l.b16 %v400
    %v440 = vunpack.c.l.b16 %v401
    %v441 = vunpack.c.l.b16 %v402
    %v442 = vpack.c.b16 %v427, %v426
    %v443 = vpack.c.b16 %v429, %v428
    %v444 = vpack.c.b16 %v431, %v430
    %v445 = vpack.c.b16 %v433, %v432
    %v446 = vpack.c.b16 %v435, %v434
    %v447 = vpack.c.b16 %v437, %v436
    %v448 = vpack.c.b16 %v439, %v438
    %v449 = vpack.c.b16 %v441, %v440
    %458 = vmatprep.subr.bf16.mxu0 0
    %459 = vmatpush1.bf16.msra.mxu0 %v442
    %460 = vmatprep.subr.bf16.mxu0 0
    %461 = vmatpush1.bf16.msra.mxu0 %v443
    %462 = vmatprep.subr.bf16.mxu0 0
    %463 = vmatpush1.bf16.msra.mxu0 %v444
    %464 = vmatprep.subr.bf16.mxu0 0
    %465 = vmatpush1.bf16.msra.mxu0 %v445
    %466 = vmatprep.subr.bf16.mxu0 0
    %467 = vmatpush1.bf16.msra.mxu0 %v446
    %468 = vmatprep.subr.bf16.mxu0 0
    %469 = vmatpush1.bf16.msra.mxu0 %v447
    %470 = vmatprep.subr.bf16.mxu0 0
    %471 = vmatpush1.bf16.msra.mxu0 %v448
    %472 = vmatprep.subr.bf16.mxu0 0
    %473 = vmatpush1.bf16.msra.mxu0 %v449
    %474 = vmatprep.subr.bf16.mxu0 0
    %475 = vmatpush1.bf16.msra.mxu0 0
    %476 = vmatprep.subr.bf16.mxu0 0
    %477 = vmatpush1.bf16.msra.mxu0 0
    %478 = vmatprep.subr.bf16.mxu0 0
    %479 = vmatpush1.bf16.msra.mxu0 0
    %480 = vmatprep.subr.bf16.mxu0 0
    %481 = vmatpush1.bf16.msra.mxu0 0
    %482 = vmatprep.subr.bf16.mxu0 0
    %483 = vmatpush1.bf16.msra.mxu0 0
    %484 = vmatprep.subr.bf16.mxu0 0
    %485 = vmatpush1.bf16.msra.mxu0 0
    %486 = vmatprep.subr.bf16.mxu0 0
    %487 = vmatpush1.bf16.msra.mxu0 0
    %488 = vmatprep.subr.bf16.mxu0 0
    %489 = vmatpush1.bf16.msra.mxu0 0
    %490 = vmatprep.mubr.bf16.mxu0 0
    %491 = vmatmul.mubr.bf16.gmra.mrb[0].mxu0 %v379
    %v492 = vpop.f32.mrb[0].mxu0
    %v493 = vadd.f32 %v408, %v492
    %v494 = vpop.f32.mrb[0].mxu0
    %v495 = vpop.f32.mrb[0].mxu0
    %v496 = vadd.f32 %v408, %v495
    %v497 = vpop.f32.mrb[0].mxu0
    %498 = vmatprep.mubr.bf16.mxu0 0
    %499 = vmatmul.mubr.bf16.gmra.mrb[0].mxu0 %v380
    %v500 = vpop.f32.mrb[0].mxu0
    %v501 = vadd.f32 %v408, %v500
    %v502 = vpop.f32.mrb[0].mxu0
    %v503 = vpop.f32.mrb[0].mxu0
    %v504 = vadd.f32 %v408, %v503
    %v505 = vpop.f32.mrb[0].mxu0
    %506 = vmatprep.mubr.bf16.mxu0 0
    %507 = vmatmul.mubr.bf16.gmra.mrb[0].mxu0 %v381
    %v508 = vpop.f32.mrb[0].mxu0
    %v509 = vadd.f32 %v408, %v508
    %v510 = vpop.f32.mrb[0].mxu0
    %v511 = vpop.f32.mrb[0].mxu0
    %v512 = vadd.f32 %v408, %v511
    %v513 = vpop.f32.mrb[0].mxu0
    %514 = vmatprep.mubr.bf16.mxu0 0
    %515 = vmatmul.mubr.bf16.gmra.mrb[0].mxu0 %v382
    %v516 = vpop.f32.mrb[0].mxu0
    %v517 = vadd.f32 %v408, %v516
    %v518 = vpop.f32.mrb[0].mxu0
    %v519 = vpop.f32.mrb[0].mxu0
    %v520 = vadd.f32 %v408, %v519
    %v521 = vpop.f32.mrb[0].mxu0
    %522 = vmatprep.mubr.bf16.mxu0 0
    %523 = vmatmul.mubr.bf16.gmra.mrb[0].mxu0 %v383
    %v524 = vpop.f32.mrb[0].mxu0
    %v525 = vadd.f32 %v408, %v524
    %v526 = vpop.f32.mrb[0].mxu0
    %v527 = vpop.f32.mrb[0].mxu0
    %v528 = vadd.f32 %v408, %v527
    %v529 = vpop.f32.mrb[0].mxu0
    %530 = vmatprep.mubr.bf16.mxu0 0
    %531 = vmatmul.mubr.bf16.gmra.mrb[0].mxu0 %v384
    %v532 = vpop.f32.mrb[0].mxu0
    %v533 = vadd.f32 %v408, %v532
    %v534 = vpop.f32.mrb[0].mxu0
    %v535 = vpop.f32.mrb[0].mxu0
    %v536 = vadd.f32 %v408, %v535
    %v537 = vpop.f32.mrb[0].mxu0
    %538 = vmatprep.mubr.bf16.mxu0 0
    %539 = vmatmul.mubr.bf16.gmra.mrb[0].mxu0 %v385
    %v540 = vpop.f32.mrb[0].mxu0
    %v541 = vadd.f32 %v408, %v540
    %v542 = vpop.f32.mrb[0].mxu0
    %v543 = vpop.f32.mrb[0].mxu0
    %v544 = vadd.f32 %v408, %v543
    %v545 = vpop.f32.mrb[0].mxu0
    %546 = vmatprep.mubr.bf16.mxu0 0
    %547 = vmatmul.mubr.bf16.gmra.mrb[0].mxu0 %v386
    %v548 = vpop.f32.mrb[0].mxu0
    %v549 = vadd.f32 %v408, %v548
    %v550 = vpop.f32.mrb[0].mxu0
    %v551 = vpop.f32.mrb[0].mxu0
    %v552 = vadd.f32 %v408, %v551
    %v553 = vpop.f32.mrb[0].mxu0
    %554 = vdwg.mxu0
    %v555 = vpack.c.bf16 %v496, %v493
    %v556 = vpack.c.bf16 %v504, %v501
    %v557 = vpack.c.bf16 %v512, %v509
    %v558 = vpack.c.bf16 %v520, %v517
    %v559 = vpack.c.bf16 %v528, %v525
    %v560 = vpack.c.bf16 %v536, %v533
    %v561 = vpack.c.bf16 %v544, %v541
    %v562 = vpack.c.bf16 %v552, %v549
    %v571 = vunpack.c.l.b16 %v555
    %v572 = vunpack.c.h.b16 %v555
    %v573 = vunpack.c.l.b16 %v556
    %v574 = vunpack.c.h.b16 %v556
    %v575 = vunpack.c.l.b16 %v557
    %v576 = vunpack.c.h.b16 %v557
    %v577 = vunpack.c.l.b16 %v558
    %v578 = vunpack.c.h.b16 %v558
    %v579 = vunpack.c.l.b16 %v559
    %v580 = vunpack.c.h.b16 %v559
    %v581 = vunpack.c.l.b16 %v560
    %v582 = vunpack.c.h.b16 %v560
    %v583 = vunpack.c.l.b16 %v561
    %v584 = vunpack.c.h.b16 %v561
    %v585 = vunpack.c.l.b16 %v562
    %v586 = vunpack.c.h.b16 %v562
    %v587 = vpack.c.b16 %v571, %v571
    %v588 = vpack.c.b16 %v572, %v572
    %v589 = vpack.c.b16 %v573, %v573
    %v590 = vpack.c.b16 %v574, %v574
    %v591 = vpack.c.b16 %v575, %v575
    %v592 = vpack.c.b16 %v576, %v576
    %v593 = vpack.c.b16 %v577, %v577
    %v594 = vpack.c.b16 %v578, %v578
    %v595 = vpack.c.b16 %v579, %v579
    %v596 = vpack.c.b16 %v580, %v580
    %v597 = vpack.c.b16 %v581, %v581
    %v598 = vpack.c.b16 %v582, %v582
    %v599 = vpack.c.b16 %v583, %v583
    %v600 = vpack.c.b16 %v584, %v584
    %v601 = vpack.c.b16 %v585, %v585
    %v602 = vpack.c.b16 %v586, %v586
    %619 = vst [vmem:[%s5] sm:$0xf] %v587
    %620 = vst [vmem:[%s5 + $0x4] sm:$0xf] %v588
    %621 = vst [vmem:[%s5 + $0x8] sm:$0xf] %v589
    %622 = vst [vmem:[%s5 + $0xc] sm:$0xf] %v590
    %623 = vst [vmem:[%s5 + $0x10] sm:$0xf] %v591
    %624 = vst [vmem:[%s5 + $0x14] sm:$0xf] %v592
    %625 = vst [vmem:[%s5 + $0x18] sm:$0xf] %v593
    %626 = vst [vmem:[%s5 + $0x1c] sm:$0xf] %v594
    %627 = vst [vmem:[%s5 + $0x20] sm:$0xf] %v595
    %628 = vst [vmem:[%s5 + $0x24] sm:$0xf] %v596
    %629 = vst [vmem:[%s5 + $0x28] sm:$0xf] %v597
    %630 = vst [vmem:[%s5 + $0x2c] sm:$0xf] %v598
    %631 = vst [vmem:[%s5 + $0x30] sm:$0xf] %v599
    %632 = vst [vmem:[%s5 + $0x34] sm:$0xf] %v600
    %633 = vst [vmem:[%s5 + $0x38] sm:$0xf] %v601
    %634 = vst [vmem:[%s5 + $0x3c] sm:$0xf] %v602
    // Predicated region
    $region26: #{_forward_impl.1} parent=1 // pred_check
      _
    $region27: #{_forward_impl.1} parent=1 // pred_check_branch
      %636 = sbr.rel (0) target = $region29
    $region28: #{_forward_impl.1} parent=1 // pred_region
      _
    $region29: #{_forward_impl.1} parent=1 // pred_fallthru
      _
    // Predicated region
    $region30: #{_forward_impl.1} parent=1 // pred_check
      _
    $region31: #{_forward_impl.1} parent=1 // pred_check_branch
      %638 = sbr.rel (0) target = $region33
    $region32: #{_forward_impl.1} parent=1 // pred_region
      _
    $region33: #{_forward_impl.1} parent=1 // pred_fallthru
      _
    %639 = vsyncpa [#allocation3], 1

// kernel: _forward_impl.1
$region0: #{_forward_impl.1}
  #allocation0 [shape = 'u32[]', space=smem, size = 0x4, offset = 0x4, fixed_abs, tag = 'smem constant byte address 0x4 - core index']
  #allocation1 [shape = 'u32[144,128]{1,0:T(1,128)}', space=vmem, size = 0x12000, scoped, tag = 'internal scratch']
  %s0 = inlined_call_operand.vmem [shape: bf16[128,128], index: 0, kind: input, shape index: {}]
  %s1 = inlined_call_operand.vmem [shape: bf16[128,128], index: 1, kind: input, shape index: {}]
  %s2 = inlined_call_operand.vmem [shape: f32[1,128], index: 2, kind: input, shape index: {}]
  %s3 = inlined_call_operand.hbm [shape: bf16[128,128], index: 3, kind: input, shape index: {}]
  %s4 = inlined_call_operand.vmem [shape: f32[1,128], index: 4, kind: input, shape index: {}]
  %s5 = inlined_call_operand.vmem [shape: bf16[128,128], index: 5, kind: output, shape index: {}]
  %s6 = sld [smem:[#allocation0]]
  $region34: #{_forward_impl.1} parent=0
    _
  %s8 = ssub.s32 1, %s6
  %s9 = scalar_select 0, %s8, %s6
  $region1: #{_forward_impl.1} parent=0
    #allocation2 [shape = 'u8[32768]{0}', space=vmem, size = 0x8000, scoped, tag = 'input window, operand 3, single buffered']
    #allocation3 [shape = 's32[1]{0}', space=sflag, size = 0x4, scoped, tag = 'scoped memory for _forward_impl.1']
    %10 = vsyncpa [#allocation3], 0
    // Predicated region
    $region2: #{_forward_impl.1} parent=1 // pred_check
      _
    $region3: #{_forward_impl.1} parent=1 // pred_check_branch
      %12 = sbr.rel (0) target = $region5
    $region4: #{_forward_impl.1} parent=1 // pred_region
      _
    $region5: #{_forward_impl.1} parent=1 // pred_fallthru
      _
    // Predicated region
    $region6: #{_forward_impl.1} parent=1 // pred_check
      _
    $region7: #{_forward_impl.1} parent=1 // pred_check_branch
      %14 = sbr.rel (0) target = $region9
    $region8: #{_forward_impl.1} parent=1 // pred_region
      _
    $region9: #{_forward_impl.1} parent=1 // pred_fallthru
      _
    // Predicated region
    $region10: #{_forward_impl.1} parent=1 // pred_check
      _
    $region11: #{_forward_impl.1} parent=1 // pred_check_branch
      %16 = sbr.rel (0) target = $region13
    $region12: #{_forward_impl.1} parent=1 // pred_region
      _
    $region13: #{_forward_impl.1} parent=1 // pred_fallthru
      _
    // Predicated region
    $region14: #{_forward_impl.1} parent=1 // pred_check
      _
    $region15: #{_forward_impl.1} parent=1 // pred_check_branch
      %18 = sbr.rel (0) target = $region17
    $region16: #{_forward_impl.1} parent=1 // pred_region
      %s20 = ssub.s32 1024, 1024
      %21 = vsyncadd [#allocation3], %s20
      %s22 = sshll.u32 [#allocation2], 4
      %s23 = int_to_ptr.vmem [resolvable:$true] %s22
      %28 = dma.hbm_to_vmem [thread:$0]  %s3, 1024, %s23, [#allocation3], 64, 64, 4
    $region17: #{_forward_impl.1} parent=1 // pred_fallthru
      _
    // Predicated region
    $region18: #{_forward_impl.1} parent=1 // pred_check
      _
    $region19: #{_forward_impl.1} parent=1 // pred_check_branch
      %30 = sbr.rel (0) target = $region21
    $region20: #{_forward_impl.1} parent=1 // pred_region
      _
    $region21: #{_forward_impl.1} parent=1 // pred_fallthru
      _
    // Predicated region
    $region22: #{_forward_impl.1} parent=1 // pred_check
      _
    $region23: #{_forward_impl.1} parent=1 // pred_check_branch
      %32 = sbr.rel (0) target = $region25
    $region24: #{_forward_impl.1} parent=1 // pred_region
      %33 = dma.done [#allocation3], 1024
    $region25: #{_forward_impl.1} parent=1 // pred_fallthru
      _
    %v35 = vld [vmem:[%s0] sm:$0xf]
    %v36 = vld [vmem:[%s0 + $0x4] sm:$0xf]
    %v37 = vld [vmem:[%s0 + $0x8] sm:$0xf]
    %v38 = vld [vmem:[%s0 + $0xc] sm:$0xf]
    %v39 = vld [vmem:[%s0 + $0x10] sm:$0xf]
    %v40 = vld [vmem:[%s0 + $0x14] sm:$0xf]
    %v41 = vld [vmem:[%s0 + $0x18] sm:$0xf]
    %v42 = vld [vmem:[%s0 + $0x1c] sm:$0xf]
    %v43 = vld [vmem:[%s0 + $0x20] sm:$0xf]
    %v44 = vld [vmem:[%s0 + $0x24] sm:$0xf]
    %v45 = vld [vmem:[%s0 + $0x28] sm:$0xf]
    %v46 = vld [vmem:[%s0 + $0x2c] sm:$0xf]
    %v47 = vld [vmem:[%s0 + $0x30] sm:$0xf]
    %v48 = vld [vmem:[%s0 + $0x34] sm:$0xf]
    %v49 = vld [vmem:[%s0 + $0x38] sm:$0xf]
    %v50 = vld [vmem:[%s0 + $0x3c] sm:$0xf]
    %v51 = vld [vmem:[%s1] sm:$0xf]
    %v52 = vld [vmem:[%s1 + $0x4] sm:$0xf]
    %v53 = vld [vmem:[%s1 + $0x8] sm:$0xf]
    %v54 = vld [vmem:[%s1 + $0xc] sm:$0xf]
    %v55 = vld [vmem:[%s1 + $0x10] sm:$0xf]
    %v56 = vld [vmem:[%s1 + $0x14] sm:$0xf]
    %v57 = vld [vmem:[%s1 + $0x18] sm:$0xf]
    %v58 = vld [vmem:[%s1 + $0x1c] sm:$0xf]
    %v59 = vld [vmem:[%s1 + $0x20] sm:$0xf]
    %v60 = vld [vmem:[%s1 + $0x24] sm:$0xf]
    %v61 = vld [vmem:[%s1 + $0x28] sm:$0xf]
    %v62 = vld [vmem:[%s1 + $0x2c] sm:$0xf]
    %v63 = vld [vmem:[%s1 + $0x30] sm:$0xf]
    %v64 = vld [vmem:[%s1 + $0x34] sm:$0xf]
    %v65 = vld [vmem:[%s1 + $0x38] sm:$0xf]
    %v66 = vld [vmem:[%s1 + $0x3c] sm:$0xf]
    %v67 = vld [vmem:[%s2] sm:$0x1]
    %v69 = vlaneseq
    %v70 = vshrl.u32 %v69, 7
    %v71 = vsub.s32 0, %v70
    %v72 = vrot.slane %v67, %v71
    %v90 = vunpack.c.l.b16 %v35
    %v91 = vunpack.c.l.b16 %v36
    %v92 = vunpack.c.l.b16 %v37
    %v93 = vunpack.c.l.b16 %v38
    %v94 = vunpack.c.l.b16 %v39
    %v95 = vunpack.c.l.b16 %v40
    %v96 = vunpack.c.l.b16 %v41
    %v97 = vunpack.c.l.b16 %v42
    %v98 = vunpack.c.l.b16 %v43
    %v99 = vunpack.c.l.b16 %v44
    %v100 = vunpack.c.l.b16 %v45
    %v101 = vunpack.c.l.b16 %v46
    %v102 = vunpack.c.l.b16 %v47
    %v103 = vunpack.c.l.b16 %v48
    %v104 = vunpack.c.l.b16 %v49
    %v105 = vunpack.c.l.b16 %v50
    %v106 = vpack.c.b16 %v91, %v90
    %v107 = vpack.c.b16 %v93, %v92
    %v108 = vpack.c.b16 %v95, %v94
    %v109 = vpack.c.b16 %v97, %v96
    %v110 = vpack.c.b16 %v99, %v98
    %v111 = vpack.c.b16 %v101, %v100
    %v112 = vpack.c.b16 %v103, %v102
    %v113 = vpack.c.b16 %v105, %v104
    %v138 = vunpack.c.l.b16 %v51
    %v139 = vunpack.c.l.b16 %v52
    %v140 = vunpack.c.l.b16 %v53
    %v141 = vunpack.c.l.b16 %v54
    %v142 = vunpack.c.l.b16 %v55
    %v143 = vunpack.c.l.b16 %v56
    %v144 = vunpack.c.l.b16 %v57
    %v145 = vunpack.c.l.b16 %v58
    %v146 = vunpack.c.l.b16 %v59
    %v147 = vunpack.c.l.b16 %v60
    %v148 = vunpack.c.l.b16 %v61
    %v149 = vunpack.c.l.b16 %v62
    %v150 = vunpack.c.l.b16 %v63
    %v151 = vunpack.c.l.b16 %v64
    %v152 = vunpack.c.l.b16 %v65
    %v153 = vunpack.c.l.b16 %v66
    %v154 = vpack.c.b16 %v139, %v138
    %v155 = vpack.c.b16 %v141, %v140
    %v156 = vpack.c.b16 %v143, %v142
    %v157 = vpack.c.b16 %v145, %v144
    %v158 = vpack.c.b16 %v147, %v146
    %v159 = vpack.c.b16 %v149, %v148
    %v160 = vpack.c.b16 %v151, %v150
    %v161 = vpack.c.b16 %v153, %v152
    %170 = vmatprep.subr.bf16.mxu0 0
    %171 = vmatpush1.bf16.msra.mxu0 %v154
    %172 = vmatprep.subr.bf16.mxu0 0
    %173 = vmatpush1.bf16.msra.mxu0 %v155
    %174 = vmatprep.subr.bf16.mxu0 0
    %175 = vmatpush1.bf16.msra.mxu0 %v156
    %176 = vmatprep.subr.bf16.mxu0 0
    %177 = vmatpush1.bf16.msra.mxu0 %v157
    %178 = vmatprep.subr.bf16.mxu0 0
    %179 = vmatpush1.bf16.msra.mxu0 %v158
    %180 = vmatprep.subr.bf16.mxu0 0
    %181 = vmatpush1.bf16.msra.mxu0 %v159
    %182 = vmatprep.subr.bf16.mxu0 0
    %183 = vmatpush1.bf16.msra.mxu0 %v160
    %184 = vmatprep.subr.bf16.mxu0 0
    %185 = vmatpush1.bf16.msra.mxu0 %v161
    %186 = vmatprep.subr.bf16.mxu0 0
    %187 = vmatpush1.bf16.msra.mxu0 0
    %188 = vmatprep.subr.bf16.mxu0 0
    %189 = vmatpush1.bf16.msra.mxu0 0
    %190 = vmatprep.subr.bf16.mxu0 0
    %191 = vmatpush1.bf16.msra.mxu0 0
    %192 = vmatprep.subr.bf16.mxu0 0
    %193 = vmatpush1.bf16.msra.mxu0 0
    %194 = vmatprep.subr.bf16.mxu0 0
    %195 = vmatpush1.bf16.msra.mxu0 0
    %196 = vmatprep.subr.bf16.mxu0 0
    %197 = vmatpush1.bf16.msra.mxu0 0
    %198 = vmatprep.subr.bf16.mxu0 0
    %199 = vmatpush1.bf16.msra.mxu0 0
    %200 = vmatprep.subr.bf16.mxu0 0
    %201 = vmatpush1.bf16.msra.mxu0 0
    %202 = vmatprep.mubr.bf16.mxu0 0
    %203 = vmatmul.mubr.bf16.gmra.mrb[0].mxu0 %v106
    %v204 = vpop.f32.mrb[0].mxu0
    %v205 = vadd.f32 %v72, %v204
    %v206 = vpop.f32.mrb[0].mxu0
    %v207 = vpop.f32.mrb[0].mxu0
    %v208 = vadd.f32 %v72, %v207
    %v209 = vpop.f32.mrb[0].mxu0
    %210 = vmatprep.mubr.bf16.mxu0 0
    %211 = vmatmul.mubr.bf16.gmra.mrb[0].mxu0 %v107
    %v212 = vpop.f32.mrb[0].mxu0
    %v213 = vadd.f32 %v72, %v212
    %v214 = vpop.f32.mrb[0].mxu0
    %v215 = vpop.f32.mrb[0].mxu0
    %v216 = vadd.f32 %v72, %v215
    %v217 = vpop.f32.mrb[0].mxu0
    %218 = vmatprep.mubr.bf16.mxu0 0
    %219 = vmatmul.mubr.bf16.gmra.mrb[0].mxu0 %v108
    %v220 = vpop.f32.mrb[0].mxu0
    %v221 = vadd.f32 %v72, %v220
    %v222 = vpop.f32.mrb[0].mxu0
    %v223 = vpop.f32.mrb[0].mxu0
    %v224 = vadd.f32 %v72, %v223
    %v225 = vpop.f32.mrb[0].mxu0
    %226 = vmatprep.mubr.bf16.mxu0 0
    %227 = vmatmul.mubr.bf16.gmra.mrb[0].mxu0 %v109
    %v228 = vpop.f32.mrb[0].mxu0
    %v229 = vadd.f32 %v72, %v228
    %v230 = vpop.f32.mrb[0].mxu0
    %v231 = vpop.f32.mrb[0].mxu0
    %v232 = vadd.f32 %v72, %v231
    %v233 = vpop.f32.mrb[0].mxu0
    %234 = vmatprep.mubr.bf16.mxu0 0
    %235 = vmatmul.mubr.bf16.gmra.mrb[0].mxu0 %v110
    %v236 = vpop.f32.mrb[0].mxu0
    %v237 = vadd.f32 %v72, %v236
    %v238 = vpop.f32.mrb[0].mxu0
    %v239 = vpop.f32.mrb[0].mxu0
    %v240 = vadd.f32 %v72, %v239
    %v241 = vpop.f32.mrb[0].mxu0
    %242 = vmatprep.mubr.bf16.mxu0 0
    %243 = vmatmul.mubr.bf16.gmra.mrb[0].mxu0 %v111
    %v244 = vpop.f32.mrb[0].mxu0
    %v245 = vadd.f32 %v72, %v244
    %v246 = vpop.f32.mrb[0].mxu0
    %v247 = vpop.f32.mrb[0].mxu0
    %v248 = vadd.f32 %v72, %v247
    %v249 = vpop.f32.mrb[0].mxu0
    %250 = vmatprep.mubr.bf16.mxu0 0
    %251 = vmatmul.mubr.bf16.gmra.mrb[0].mxu0 %v112
    %v252 = vpop.f32.mrb[0].mxu0
    %v253 = vadd.f32 %v72, %v252
    %v254 = vpop.f32.mrb[0].mxu0
    %v255 = vpop.f32.mrb[0].mxu0
    %v256 = vadd.f32 %v72, %v255
    %v257 = vpop.f32.mrb[0].mxu0
    %258 = vmatprep.mubr.bf16.mxu0 0
    %259 = vmatmul.mubr.bf16.gmra.mrb[0].mxu0 %v113
    %v260 = vpop.f32.mrb[0].mxu0
    %v261 = vadd.f32 %v72, %v260
    %v262 = vpop.f32.mrb[0].mxu0
    %v263 = vpop.f32.mrb[0].mxu0
    %v264 = vadd.f32 %v72, %v263
    %v265 = vpop.f32.mrb[0].mxu0
    %266 = vdwg.mxu0
    %v267 = vxor.u32 %v205, 2147483648
    %v268 = vxor.u32 %v208, 2147483648
    %v269 = vxor.u32 %v213, 2147483648
    %v270 = vxor.u32 %v216, 2147483648
    %v271 = vxor.u32 %v221, 2147483648
    %v272 = vxor.u32 %v224, 2147483648
    %v273 = vxor.u32 %v229, 2147483648
    %v274 = vxor.u32 %v232, 2147483648
    %v275 = vxor.u32 %v237, 2147483648
    %v276 = vxor.u32 %v240, 2147483648
    %v277 = vxor.u32 %v245, 2147483648
    %v278 = vxor.u32 %v248, 2147483648
    %v279 = vxor.u32 %v253, 2147483648
    %v280 = vxor.u32 %v256, 2147483648
    %v281 = vxor.u32 %v261, 2147483648
    %v282 = vxor.u32 %v264, 2147483648
    %v283 = vmul.f32 %v267, 1.442695
    %v284 = vpow.pop %v283
    %v285 = vmul.f32 %v268, 1.442695
    %v286 = vpow.pop %v285
    %v287 = vmul.f32 %v269, 1.442695
    %v288 = vpow.pop %v287
    %v289 = vmul.f32 %v270, 1.442695
    %v290 = vpow.pop %v289
    %v291 = vmul.f32 %v271, 1.442695
    %v292 = vpow.pop %v291
    %v293 = vmul.f32 %v272, 1.442695
    %v294 = vpow.pop %v293
    %v295 = vmul.f32 %v273, 1.442695
    %v296 = vpow.pop %v295
    %v297 = vmul.f32 %v274, 1.442695
    %v298 = vpow.pop %v297
    %v299 = vmul.f32 %v275, 1.442695
    %v300 = vpow.pop %v299
    %v301 = vmul.f32 %v276, 1.442695
    %v302 = vpow.pop %v301
    %v303 = vmul.f32 %v277, 1.442695
    %v304 = vpow.pop %v303
    %v305 = vmul.f32 %v278, 1.442695
    %v306 = vpow.pop %v305
    %v307 = vmul.f32 %v279, 1.442695
    %v308 = vpow.pop %v307
    %v309 = vmul.f32 %v280, 1.442695
    %v310 = vpow.pop %v309
    %v311 = vmul.f32 %v281, 1.442695
    %v312 = vpow.pop %v311
    %v313 = vmul.f32 %v282, 1.442695
    %v314 = vpow.pop %v313
    %v315 = vadd.f32 %v284, 1.0
    %v316 = vadd.f32 %v286, 1.0
    %v317 = vadd.f32 %v288, 1.0
    %v318 = vadd.f32 %v290, 1.0
    %v319 = vadd.f32 %v292, 1.0
    %v320 = vadd.f32 %v294, 1.0
    %v321 = vadd.f32 %v296, 1.0
    %v322 = vadd.f32 %v298, 1.0
    %v323 = vadd.f32 %v300, 1.0
    %v324 = vadd.f32 %v302, 1.0
    %v325 = vadd.f32 %v304, 1.0
    %v326 = vadd.f32 %v306, 1.0
    %v327 = vadd.f32 %v308, 1.0
    %v328 = vadd.f32 %v310, 1.0
    %v329 = vadd.f32 %v312, 1.0
    %v330 = vadd.f32 %v314, 1.0
    %v331 = vrcp.pop %v315
    %v332 = vmul.f32 1.0, %v331
    %v333 = vrcp.pop %v316
    %v334 = vmul.f32 1.0, %v333
    %v335 = vrcp.pop %v317
    %v336 = vmul.f32 1.0, %v335
    %v337 = vrcp.pop %v318
    %v338 = vmul.f32 1.0, %v337
    %v339 = vrcp.pop %v319
    %v340 = vmul.f32 1.0, %v339
    %v341 = vrcp.pop %v320
    %v342 = vmul.f32 1.0, %v341
    %v343 = vrcp.pop %v321
    %v344 = vmul.f32 1.0, %v343
    %v345 = vrcp.pop %v322
    %v346 = vmul.f32 1.0, %v345
    %v347 = vrcp.pop %v323
    %v348 = vmul.f32 1.0, %v347
    %v349 = vrcp.pop %v324
    %v350 = vmul.f32 1.0, %v349
    %v351 = vrcp.pop %v325
    %v352 = vmul.f32 1.0, %v351
    %v353 = vrcp.pop %v326
    %v354 = vmul.f32 1.0, %v353
    %v355 = vrcp.pop %v327
    %v356 = vmul.f32 1.0, %v355
    %v357 = vrcp.pop %v328
    %v358 = vmul.f32 1.0, %v357
    %v359 = vrcp.pop %v329
    %v360 = vmul.f32 1.0, %v359
    %v361 = vrcp.pop %v330
    %v362 = vmul.f32 1.0, %v361
    %v363 = vmul.f32 %v205, %v332
    %v364 = vmul.f32 %v208, %v334
    %v365 = vmul.f32 %v213, %v336
    %v366 = vmul.f32 %v216, %v338
    %v367 = vmul.f32 %v221, %v340
    %v368 = vmul.f32 %v224, %v342
    %v369 = vmul.f32 %v229, %v344
    %v370 = vmul.f32 %v232, %v346
    %v371 = vmul.f32 %v237, %v348
    %v372 = vmul.f32 %v240, %v350
    %v373 = vmul.f32 %v245, %v352
    %v374 = vmul.f32 %v248, %v354
    %v375 = vmul.f32 %v253, %v356
    %v376 = vmul.f32 %v256, %v358
    %v377 = vmul.f32 %v261, %v360
    %v378 = vmul.f32 %v264, %v362
    %v379 = vpack.c.bf16 %v364, %v363
    %v380 = vpack.c.bf16 %v366, %v365
    %v381 = vpack.c.bf16 %v368, %v367
    %v382 = vpack.c.bf16 %v370, %v369
    %v383 = vpack.c.bf16 %v372, %v371
    %v384 = vpack.c.bf16 %v374, %v373
    %v385 = vpack.c.bf16 %v376, %v375
    %v386 = vpack.c.bf16 %v378, %v377
    %v387 = vld [vmem:[#allocation2] sm:$0xf]
    %v388 = vld [vmem:[#allocation2 + $0x4] sm:$0xf]
    %v389 = vld [vmem:[#allocation2 + $0x8] sm:$0xf]
    %v390 = vld [vmem:[#allocation2 + $0xc] sm:$0xf]
    %v391 = vld [vmem:[#allocation2 + $0x10] sm:$0xf]
    %v392 = vld [vmem:[#allocation2 + $0x14] sm:$0xf]
    %v393 = vld [vmem:[#allocation2 + $0x18] sm:$0xf]
    %v394 = vld [vmem:[#allocation2 + $0x1c] sm:$0xf]
    %v395 = vld [vmem:[#allocation2 + $0x20] sm:$0xf]
    %v396 = vld [vmem:[#allocation2 + $0x24] sm:$0xf]
    %v397 = vld [vmem:[#allocation2 + $0x28] sm:$0xf]
    %v398 = vld [vmem:[#allocation2 + $0x2c] sm:$0xf]
    %v399 = vld [vmem:[#allocation2 + $0x30] sm:$0xf]
    %v400 = vld [vmem:[#allocation2 + $0x34] sm:$0xf]
    %v401 = vld [vmem:[#allocation2 + $0x38] sm:$0xf]
    %v402 = vld [vmem:[#allocation2 + $0x3c] sm:$0xf]
    %v403 = vld [vmem:[%s4] sm:$0x1]
    %v405 = vlaneseq
    %v406 = vshrl.u32 %v405, 7
    %v407 = vsub.s32 0, %v406
    %v408 = vrot.slane %v403, %v407
    %v426 = vunpack.c.l.b16 %v387
    %v427 = vunpack.c.l.b16 %v388
    %v428 = vunpack.c.l.b16 %v389
    %v429 = vunpack.c.l.b16 %v390
    %v430 = vunpack.c.l.b16 %v391
    %v431 = vunpack.c.l.b16 %v392
    %v432 = vunpack.c.l.b16 %v393
    %v433 = vunpack.c.l.b16 %v394
    %v434 = vunpack.c.l.b16 %v395
    %v435 = vunpack.c.l.b16 %v396
    %v436 = vunpack.c.l.b16 %v397
    %v437 = vunpack.c.l.b16 %v398
    %v438 = vunpack.c.l.b16 %v399
    %v439 = vunpack.c.l.b16 %v400
    %v440 = vunpack.c.l.b16 %v401
    %v441 = vunpack.c.l.b16 %v402
    %v442 = vpack.c.b16 %v427, %v426
    %v443 = vpack.c.b16 %v429, %v428
    %v444 = vpack.c.b16 %v431, %v430
    %v445 = vpack.c.b16 %v433, %v432
    %v446 = vpack.c.b16 %v435, %v434
    %v447 = vpack.c.b16 %v437, %v436
    %v448 = vpack.c.b16 %v439, %v438
    %v449 = vpack.c.b16 %v441, %v440
    %458 = vmatprep.subr.bf16.mxu0 0
    %459 = vmatpush1.bf16.msra.mxu0 %v442
    %460 = vmatprep.subr.bf16.mxu0 0
    %461 = vmatpush1.bf16.msra.mxu0 %v443
    %462 = vmatprep.subr.bf16.mxu0 0
    %463 = vmatpush1.bf16.msra.mxu0 %v444
    %464 = vmatprep.subr.bf16.mxu0 0
    %465 = vmatpush1.bf16.msra.mxu0 %v445
    %466 = vmatprep.subr.bf16.mxu0 0
    %467 = vmatpush1.bf16.msra.mxu0 %v446
    %468 = vmatprep.subr.bf16.mxu0 0
    %469 = vmatpush1.bf16.msra.mxu0 %v447
    %470 = vmatprep.subr.bf16.mxu0 0
    %471 = vmatpush1.bf16.msra.mxu0 %v448
    %472 = vmatprep.subr.bf16.mxu0 0
    %473 = vmatpush1.bf16.msra.mxu0 %v449
    %474 = vmatprep.subr.bf16.mxu0 0
    %475 = vmatpush1.bf16.msra.mxu0 0
    %476 = vmatprep.subr.bf16.mxu0 0
    %477 = vmatpush1.bf16.msra.mxu0 0
    %478 = vmatprep.subr.bf16.mxu0 0
    %479 = vmatpush1.bf16.msra.mxu0 0
    %480 = vmatprep.subr.bf16.mxu0 0
    %481 = vmatpush1.bf16.msra.mxu0 0
    %482 = vmatprep.subr.bf16.mxu0 0
    %483 = vmatpush1.bf16.msra.mxu0 0
    %484 = vmatprep.subr.bf16.mxu0 0
    %485 = vmatpush1.bf16.msra.mxu0 0
    %486 = vmatprep.subr.bf16.mxu0 0
    %487 = vmatpush1.bf16.msra.mxu0 0
    %488 = vmatprep.subr.bf16.mxu0 0
    %489 = vmatpush1.bf16.msra.mxu0 0
    %490 = vmatprep.mubr.bf16.mxu0 0
    %491 = vmatmul.mubr.bf16.gmra.mrb[0].mxu0 %v379
    %v492 = vpop.f32.mrb[0].mxu0
    %v493 = vadd.f32 %v408, %v492
    %v494 = vpop.f32.mrb[0].mxu0
    %v495 = vpop.f32.mrb[0].mxu0
    %v496 = vadd.f32 %v408, %v495
    %v497 = vpop.f32.mrb[0].mxu0
    %498 = vmatprep.mubr.bf16.mxu0 0
    %499 = vmatmul.mubr.bf16.gmra.mrb[0].mxu0 %v380
    %v500 = vpop.f32.mrb[0].mxu0
    %v501 = vadd.f32 %v408, %v500
    %v502 = vpop.f32.mrb[0].mxu0
    %v503 = vpop.f32.mrb[0].mxu0
    %v504 = vadd.f32 %v408, %v503
    %v505 = vpop.f32.mrb[0].mxu0
    %506 = vmatprep.mubr.bf16.mxu0 0
    %507 = vmatmul.mubr.bf16.gmra.mrb[0].mxu0 %v381
    %v508 = vpop.f32.mrb[0].mxu0
    %v509 = vadd.f32 %v408, %v508
    %v510 = vpop.f32.mrb[0].mxu0
    %v511 = vpop.f32.mrb[0].mxu0
    %v512 = vadd.f32 %v408, %v511
    %v513 = vpop.f32.mrb[0].mxu0
    %514 = vmatprep.mubr.bf16.mxu0 0
    %515 = vmatmul.mubr.bf16.gmra.mrb[0].mxu0 %v382
    %v516 = vpop.f32.mrb[0].mxu0
    %v517 = vadd.f32 %v408, %v516
    %v518 = vpop.f32.mrb[0].mxu0
    %v519 = vpop.f32.mrb[0].mxu0
    %v520 = vadd.f32 %v408, %v519
    %v521 = vpop.f32.mrb[0].mxu0
    %522 = vmatprep.mubr.bf16.mxu0 0
    %523 = vmatmul.mubr.bf16.gmra.mrb[0].mxu0 %v383
    %v524 = vpop.f32.mrb[0].mxu0
    %v525 = vadd.f32 %v408, %v524
    %v526 = vpop.f32.mrb[0].mxu0
    %v527 = vpop.f32.mrb[0].mxu0
    %v528 = vadd.f32 %v408, %v527
    %v529 = vpop.f32.mrb[0].mxu0
    %530 = vmatprep.mubr.bf16.mxu0 0
    %531 = vmatmul.mubr.bf16.gmra.mrb[0].mxu0 %v384
    %v532 = vpop.f32.mrb[0].mxu0
    %v533 = vadd.f32 %v408, %v532
    %v534 = vpop.f32.mrb[0].mxu0
    %v535 = vpop.f32.mrb[0].mxu0
    %v536 = vadd.f32 %v408, %v535
    %v537 = vpop.f32.mrb[0].mxu0
    %538 = vmatprep.mubr.bf16.mxu0 0
    %539 = vmatmul.mubr.bf16.gmra.mrb[0].mxu0 %v385
    %v540 = vpop.f32.mrb[0].mxu0
    %v541 = vadd.f32 %v408, %v540
    %v542 = vpop.f32.mrb[0].mxu0
    %v543 = vpop.f32.mrb[0].mxu0
    %v544 = vadd.f32 %v408, %v543
    %v545 = vpop.f32.mrb[0].mxu0
    %546 = vmatprep.mubr.bf16.mxu0 0
    %547 = vmatmul.mubr.bf16.gmra.mrb[0].mxu0 %v386
    %v548 = vpop.f32.mrb[0].mxu0
    %v549 = vadd.f32 %v408, %v548
    %v550 = vpop.f32.mrb[0].mxu0
    %v551 = vpop.f32.mrb[0].mxu0
    %v552 = vadd.f32 %v408, %v551
    %v553 = vpop.f32.mrb[0].mxu0
    %554 = vdwg.mxu0
    %v555 = vpack.c.bf16 %v496, %v493
    %v556 = vpack.c.bf16 %v504, %v501
    %v557 = vpack.c.bf16 %v512, %v509
    %v558 = vpack.c.bf16 %v520, %v517
    %v559 = vpack.c.bf16 %v528, %v525
    %v560 = vpack.c.bf16 %v536, %v533
    %v561 = vpack.c.bf16 %v544, %v541
    %v562 = vpack.c.bf16 %v552, %v549
    %v571 = vunpack.c.l.b16 %v555
    %v572 = vunpack.c.h.b16 %v555
    %v573 = vunpack.c.l.b16 %v556
    %v574 = vunpack.c.h.b16 %v556
    %v575 = vunpack.c.l.b16 %v557
    %v576 = vunpack.c.h.b16 %v557
    %v577 = vunpack.c.l.b16 %v558
    %v578 = vunpack.c.h.b16 %v558
    %v579 = vunpack.c.l.b16 %v559
    %v580 = vunpack.c.h.b16 %v559
    %v581 = vunpack.c.l.b16 %v560
    %v582 = vunpack.c.h.b16 %v560
    %v583 = vunpack.c.l.b16 %v561
    %v584 = vunpack.c.h.b16 %v561
    %v585 = vunpack.c.l.b16 %v562
    %v586 = vunpack.c.h.b16 %v562
    %v587 = vpack.c.b16 %v571, %v571
    %v588 = vpack.c.b16 %v572, %v572
    %v589 = vpack.c.b16 %v573, %v573
    %v590 = vpack.c.b16 %v574, %v574
    %v591 = vpack.c.b16 %v575, %v575
    %v592 = vpack.c.b16 %v576, %v576
    %v593 = vpack.c.b16 %v577, %v577
    %v594 = vpack.c.b16 %v578, %v578
    %v595 = vpack.c.b16 %v579, %v579
    %v596 = vpack.c.b16 %v580, %v580
    %v597 = vpack.c.b16 %v581, %v581
    %v598 = vpack.c.b16 %v582, %v582
    %v599 = vpack.c.b16 %v583, %v583
    %v600 = vpack.c.b16 %v584, %v584
    %v601 = vpack.c.b16 %v585, %v585
    %v602 = vpack.c.b16 %v586, %v586
    %619 = vst [vmem:[%s5] sm:$0xf] %v587
    %620 = vst [vmem:[%s5 + $0x4] sm:$0xf] %v588
    %621 = vst [vmem:[%s5 + $0x8] sm:$0xf] %v589
    %622 = vst [vmem:[%s5 + $0xc] sm:$0xf] %v590
    %623 = vst [vmem:[%s5 + $0x10] sm:$0xf] %v591
    %624 = vst [vmem:[%s5 + $0x14] sm:$0xf] %v592
    %625 = vst [vmem:[%s5 + $0x18] sm:$0xf] %v593
    %626 = vst [vmem:[%s5 + $0x1c] sm:$0xf] %v594
    %627 = vst [vmem:[%s5 + $0x20] sm:$0xf] %v595
    %628 = vst [vmem:[%s5 + $0x24] sm:$0xf] %v596
    %629 = vst [vmem:[%s5 + $0x28] sm:$0xf] %v597
    %630 = vst [vmem:[%s5 + $0x2c] sm:$0xf] %v598
    %631 = vst [vmem:[%s5 + $0x30] sm:$0xf] %v599
    %632 = vst [vmem:[%s5 + $0x34] sm:$0xf] %v600
    %633 = vst [vmem:[%s5 + $0x38] sm:$0xf] %v601
    %634 = vst [vmem:[%s5 + $0x3c] sm:$0xf] %v602
    // Predicated region
    $region26: #{_forward_impl.1} parent=1 // pred_check
      _
    $region27: #{_forward_impl.1} parent=1 // pred_check_branch
      %636 = sbr.rel (0) target = $region29
    $region28: #{_forward_impl.1} parent=1 // pred_region
      _
    $region29: #{_forward_impl.1} parent=1 // pred_fallthru
      _
    // Predicated region
    $region30: #{_forward_impl.1} parent=1 // pred_check
      _
    $region31: #{_forward_impl.1} parent=1 // pred_check_branch
      %638 = sbr.rel (0) target = $region33
    $region32: #{_forward_impl.1} parent=1 // pred_region
      _
    $region33: #{_forward_impl.1} parent=1 // pred_fallthru
      _
    %639 = vsyncpa [#allocation3], 1

</llo_original>
